<compile_context>
chip_gen: v6e
topology: v6e:2x2x1
jax: 0.10.0
libtpu: 0.0.40
codegen_flags: <defaults>
</compile_context>

<pallas_src>
import math
import functools

import jax
import jax.numpy as jnp
from jax import lax
from jax.experimental import pallas as pl
from jax.experimental.pallas import tpu as pltpu


def _round_up(n, m):
    return ((n + m - 1) // m) * m


def _multitask_head_kernel(x_ref, gamma_ref, beta_ref, w1_ref, b1_ref,
                           w2_ref, b2_ref, logits_ref, hidden_ref, *, feat):
    # ----- LayerNorm over the true `feat` lanes (eps=1e-5, torch default) ---
    x = x_ref[...].astype(jnp.float32)                        # [TB, Fp]
    inv_n = 1.0 / feat
    if feat == x.shape[-1]:
        mean = jnp.mean(x, axis=-1, keepdims=True)
        centered = x - mean
    else:
        # Padded lanes of x are exactly zero (wrapper zero-pads), so a plain
        # sum gives the true mean; mask the centered values for the variance.
        mask = lax.broadcasted_iota(jnp.int32, x.shape, 1) < feat
        mean = jnp.sum(x, axis=-1, keepdims=True) * inv_n
        centered = jnp.where(mask, x - mean, 0.0)
    var = jnp.sum(centered * centered, axis=-1, keepdims=True) * inv_n
    xn = centered * lax.rsqrt(var + 1e-5)
    # gamma/beta are zero in the padded lanes -> xn stays exactly 0 there.
    xn = xn * gamma_ref[...] + beta_ref[...]                  # [TB, Fp]

    # ----- Dropout(p=0.5): identity in eval mode -----

    # ----- Linear(F -> H) + exact GELU (torch default, erf form) -----
    h = jnp.dot(xn, w1_ref[...], preferred_element_type=jnp.float32)
    h = h + b1_ref[...]                                       # [TB, Hp]
    h = 0.5 * h * (1.0 + lax.erf(h * (1.0 / math.sqrt(2.0))))

    # ----- Dropout(p=0.3): identity in eval mode -----

    # ----- Linear(H -> C) -----
    logits = jnp.dot(h, w2_ref[...], preferred_element_type=jnp.float32)
    logits = logits + b2_ref[...]                             # [TB, Cp]

    hidden_ref[...] = h.astype(hidden_ref.dtype)
    logits_ref[...] = logits.astype(logits_ref.dtype)


@functools.partial(jax.jit, static_argnames=("block_batch",))
def multitask_head(x, gamma, beta, w1, b1, w2, b2, *, block_batch=None):
    """x: [B, F] -> (logits [B, C], hidden_features [B, H])."""
    B, F = x.shape
    H = w1.shape[1]
    C = w2.shape[1]

    # Lane-dense padded dims (multiples of 128).
    Fp = _round_up(F, 128)
    Hp = _round_up(H, 128)
    Cp = _round_up(C, 128)

    # ---- Pick the batch tile under a conservative VMEM budget. ----
    if block_batch is None:
        vmem_budget = 32 * 1024 * 1024
        # resident params, double-buffered by the pipeline
        weight_bytes = 2 * 4 * (Fp * Hp + Hp * Cp + 2 * Fp + Hp + Cp)
        # per-row double-buffered activation tiles (x, hidden, logits)
        per_row_bytes = 2 * 4 * (Fp + Hp + Cp)
        cap = max(8, (vmem_budget - weight_bytes) // per_row_bytes)
        bb = int(min(512, cap, _round_up(B, 8)))
        bb = max(8, (bb // 8) * 8)
        # If everything fits in a single step but B > 8, split into >=2 grid
        # steps so the parallel batch axis can shard across TensorCores (v7x).
        if _round_up(B, bb) == bb and B > 8:
            bb = max(8, _round_up((B + 1) // 2, 8))
    else:
        bb = int(block_batch)
    Bp = _round_up(B, bb)

    # ---- Zero-pad once in the wrapper (outside the kernel). ----
    xp = jnp.pad(x, ((0, Bp - B), (0, Fp - F)))
    gamma2 = jnp.pad(gamma, (0, Fp - F)).reshape(1, Fp)
    beta2 = jnp.pad(beta, (0, Fp - F)).reshape(1, Fp)
    w1p = jnp.pad(w1, ((0, Fp - F), (0, Hp - H)))
    b1p = jnp.pad(b1, (0, Hp - H)).reshape(1, Hp)
    w2p = jnp.pad(w2, ((0, Hp - H), (0, Cp - C)))
    b2p = jnp.pad(b2, (0, Cp - C)).reshape(1, Cp)

    grid = (Bp // bb,)

    row_spec = lambda d: pl.BlockSpec((bb, d), lambda i: (i, 0))
    full_spec = lambda r, c: pl.BlockSpec((r, c), lambda i: (0, 0))

    cost = pl.CostEstimate(
        flops=2 * Bp * Fp * Hp + 2 * Bp * Hp * Cp + 10 * Bp * Fp,
        transcendentals=Bp * Hp,                      # erf in GELU
        bytes_accessed=4 * (Bp * Fp + Fp * Hp + Hp * Cp + Bp * Hp + Bp * Cp),
    )

    logits_p, hidden_p = pl.pallas_call(
        functools.partial(_multitask_head_kernel, feat=F),
        out_shape=(
            jax.ShapeDtypeStruct((Bp, Cp), x.dtype),
            jax.ShapeDtypeStruct((Bp, Hp), x.dtype),
        ),
        grid_spec=pltpu.PrefetchScalarGridSpec(
            num_scalar_prefetch=0,
            grid=grid,
            in_specs=[
                row_spec(Fp),            # x tile
                full_spec(1, Fp),        # gamma
                full_spec(1, Fp),        # beta
                full_spec(Fp, Hp),       # W1 (resident, constant index)
                full_spec(1, Hp),        # b1
                full_spec(Hp, Cp),       # W2 (resident, constant index)
                full_spec(1, Cp),        # b2
            ],
            out_specs=[
                row_spec(Cp),            # logits tile (lane-dense)
                row_spec(Hp),            # hidden tile (lane-dense)
            ],
        ),
        compiler_params=pltpu.CompilerParams(
            dimension_semantics=("parallel",),
            vmem_limit_bytes=64 * 1024 * 1024,
        ),
        cost_estimate=cost,
    )(xp, gamma2, beta2, w1p, b1p, w2p, b2p)

    # Slice away batch/lane padding.
    return logits_p[:B, :C], hidden_p[:B, :H]


def _reference(x, gamma, beta, w1, b1, w2, b2):
    x32 = x.astype(jnp.float32)
    mean = jnp.mean(x32, axis=-1, keepdims=True)
    var = jnp.mean((x32 - mean) ** 2, axis=-1, keepdims=True)
    xn = (x32 - mean) / jnp.sqrt(var + 1e-5) * gamma + beta
    h = xn @ w1 + b1
    h = 0.5 * h * (1.0 + lax.erf(h / math.sqrt(2.0)))
    logits = h @ w2 + b2
    return logits, h


if __name__ == "__main__":
    # Small shapes consistent with the module: in_features=32,
    # hidden_layer_dim=32, num_classes=16.
    F, H, C = 32, 32, 16

    key = jax.random.PRNGKey(0)
    kx, kg, kb, kw1, kb1, kw2, kb2 = jax.random.split(key, 7)

    gamma = 1.0 + 0.1 * jax.random.normal(kg, (F,), dtype=jnp.float32)
    beta = 0.1 * jax.random.normal(kb, (F,), dtype=jnp.float32)
    w1 = jax.random.normal(kw1, (F, H), dtype=jnp.float32) / math.sqrt(F)
    b1 = 0.1 * jax.random.normal(kb1, (H,), dtype=jnp.float32)
    w2 = jax.random.normal(kw2, (H, C), dtype=jnp.float32) / math.sqrt(H)
    b2 = 0.1 * jax.random.normal(kb2, (C,), dtype=jnp.float32)

    # Case 1: tiny batch (single grid step).
    # Case 2: ragged batch (exercises zero-padding + multi-step parallel grid).
    for B in (8, 37):
        x = jax.random.normal(kx, (B, F), dtype=jnp.float32)
        logits, hidden = multitask_head(x, gamma, beta, w1, b1, w2, b2)
        jax.block_until_ready((logits, hidden))

        ref_logits, ref_hidden = _reference(x, gamma, beta, w1, b1, w2, b2)
        assert logits.shape == (B, C) and hidden.shape == (B, H)
        assert jnp.allclose(logits, ref_logits, atol=1e-4, rtol=1e-4)
        assert jnp.allclose(hidden, ref_hidden, atol=1e-4, rtol=1e-4)

    print("KERNEL_OK")
</pallas_src>

<mosaic_0001>
module attributes {stable_mosaic.version = 11 : i64} {
  func.func @_multitask_head_kernel(%arg0: i32, %arg1: memref<8x128xf32, #tpu.memory_space<vmem>>, %arg2: memref<1x128xf32, #tpu.memory_space<vmem>>, %arg3: memref<1x128xf32, #tpu.memory_space<vmem>>, %arg4: memref<128x128xf32, #tpu.memory_space<vmem>>, %arg5: memref<1x128xf32, #tpu.memory_space<vmem>>, %arg6: memref<128x128xf32, #tpu.memory_space<vmem>>, %arg7: memref<1x128xf32, #tpu.memory_space<vmem>>, %arg8: memref<8x128xf32, #tpu.memory_space<vmem>>, %arg9: memref<8x128xf32, #tpu.memory_space<vmem>>) attributes {dimension_semantics = [#tpu.dimension_semantics<parallel>], iteration_bounds = array<i64: 1>, scalar_prefetch = 0 : i64, scratch_operands = 0 : i64, tpu.core_type = #tpu.core_type<tc>, window_params = [{transform_indices = @transform_0, window_bounds = array<i64: 8, 128>}, {pipeline_mode = #tpu.pipeline_mode<synchronous>, transform_indices = @transform_1, window_bounds = array<i64: 1, 128>}, {pipeline_mode = #tpu.pipeline_mode<synchronous>, transform_indices = @transform_2, window_bounds = array<i64: 1, 128>}, {pipeline_mode = #tpu.pipeline_mode<synchronous>, transform_indices = @transform_3, window_bounds = array<i64: 128, 128>}, {pipeline_mode = #tpu.pipeline_mode<synchronous>, transform_indices = @transform_4, window_bounds = array<i64: 1, 128>}, {pipeline_mode = #tpu.pipeline_mode<synchronous>, transform_indices = @transform_5, window_bounds = array<i64: 128, 128>}, {pipeline_mode = #tpu.pipeline_mode<synchronous>, transform_indices = @transform_6, window_bounds = array<i64: 1, 128>}, {transform_indices = @transform_7, window_bounds = array<i64: 8, 128>}, {transform_indices = @transform_8, window_bounds = array<i64: 8, 128>}]} {
    %c0 = arith.constant 0 : index
    %c0_0 = arith.constant 0 : index
    %0 = vector.load %arg1[%c0, %c0_0] : memref<8x128xf32, #tpu.memory_space<vmem>>, vector<8x128xf32>
    %1 = tpu.iota {dimensions = array<i32: 1>} : vector<8x128xi32>
    %c32_i32 = arith.constant 32 : i32
    %2 = vector.broadcast %c32_i32 : i32 to vector<8x128xi32>
    %3 = arith.cmpi slt, %1, %2 : vector<8x128xi32>
    %cst = arith.constant dense<0.000000e+00> : vector<8xf32>
    %4 = vector.multi_reduction <add>, %0, %cst [1] : vector<8x128xf32> to vector<8xf32>
    %5 = vector.shape_cast %4 : vector<8xf32> to vector<8x1xf32>
    %cst_1 = arith.constant 3.125000e-02 : f32
    %6 = vector.broadcast %cst_1 : f32 to vector<8x1xf32>
    %7 = arith.mulf %5, %6 : vector<8x1xf32>
    %8 = vector.broadcast %7 : vector<8x1xf32> to vector<8x128xf32>
    %9 = arith.subf %0, %8 : vector<8x128xf32>
    %cst_2 = arith.constant 0.000000e+00 : f32
    %10 = vector.broadcast %cst_2 : f32 to vector<8x128xf32>
    %11 = arith.select %3, %9, %10 : vector<8x128xi1>, vector<8x128xf32>
    %12 = arith.mulf %11, %11 : vector<8x128xf32>
    %cst_3 = arith.constant dense<0.000000e+00> : vector<8xf32>
    %13 = vector.multi_reduction <add>, %12, %cst_3 [1] : vector<8x128xf32> to vector<8xf32>
    %14 = vector.shape_cast %13 : vector<8xf32> to vector<8x1xf32>
    %cst_4 = arith.constant 3.125000e-02 : f32
    %15 = vector.broadcast %cst_4 : f32 to vector<8x1xf32>
    %16 = arith.mulf %14, %15 : vector<8x1xf32>
    %cst_5 = arith.constant 9.99999974E-6 : f32
    %17 = vector.broadcast %cst_5 : f32 to vector<8x1xf32>
    %18 = arith.addf %16, %17 : vector<8x1xf32>
    %19 = math.rsqrt %18 : vector<8x1xf32>
    %20 = vector.broadcast %19 : vector<8x1xf32> to vector<8x128xf32>
    %21 = arith.mulf %11, %20 : vector<8x128xf32>
    %c0_6 = arith.constant 0 : index
    %c0_7 = arith.constant 0 : index
    %22 = vector.load %arg2[%c0_6, %c0_7] : memref<1x128xf32, #tpu.memory_space<vmem>>, vector<1x128xf32>
    %23 = vector.broadcast %22 : vector<1x128xf32> to vector<8x128xf32>
    %24 = arith.mulf %21, %23 : vector<8x128xf32>
    %c0_8 = arith.constant 0 : index
    %c0_9 = arith.constant 0 : index
    %25 = vector.load %arg3[%c0_8, %c0_9] : memref<1x128xf32, #tpu.memory_space<vmem>>, vector<1x128xf32>
    %26 = vector.broadcast %25 : vector<1x128xf32> to vector<8x128xf32>
    %27 = arith.addf %24, %26 : vector<8x128xf32>
    %c0_10 = arith.constant 0 : index
    %c0_11 = arith.constant 0 : index
    %28 = vector.load %arg4[%c0_10, %c0_11] : memref<128x128xf32, #tpu.memory_space<vmem>>, vector<128x128xf32>
    %cst_12 = arith.constant dense<0.000000e+00> : vector<8x128xf32>
    %29 = tpu.matmul %27, %28, %cst_12 {dimension_numbers = #tpu.dot_dimension_numbers<[1], [0], [0], [1], [0, 0, 1, 1], [], []>} : vector<8x128xf32>, vector<128x128xf32>, vector<8x128xf32> -> vector<8x128xf32>
    %c0_13 = arith.constant 0 : index
    %c0_14 = arith.constant 0 : index
    %30 = vector.load %arg5[%c0_13, %c0_14] : memref<1x128xf32, #tpu.memory_space<vmem>>, vector<1x128xf32>
    %31 = vector.broadcast %30 : vector<1x128xf32> to vector<8x128xf32>
    %32 = arith.addf %29, %31 : vector<8x128xf32>
    %cst_15 = arith.constant 5.000000e-01 : f32
    %33 = vector.broadcast %cst_15 : f32 to vector<8x128xf32>
    %34 = arith.mulf %33, %32 : vector<8x128xf32>
    %cst_16 = arith.constant 0.707106769 : f32
    %35 = vector.broadcast %cst_16 : f32 to vector<8x128xf32>
    %36 = arith.mulf %32, %35 : vector<8x128xf32>
    %37 = math.erf %36 : vector<8x128xf32>
    %cst_17 = arith.constant 1.000000e+00 : f32
    %38 = vector.broadcast %cst_17 : f32 to vector<8x128xf32>
    %39 = arith.addf %38, %37 : vector<8x128xf32>
    %40 = arith.mulf %34, %39 : vector<8x128xf32>
    %c0_18 = arith.constant 0 : index
    %c0_19 = arith.constant 0 : index
    %41 = vector.load %arg6[%c0_18, %c0_19] : memref<128x128xf32, #tpu.memory_space<vmem>>, vector<128x128xf32>
    %cst_20 = arith.constant dense<0.000000e+00> : vector<8x128xf32>
    %42 = tpu.matmul %40, %41, %cst_20 {dimension_numbers = #tpu.dot_dimension_numbers<[1], [0], [0], [1], [0, 0, 1, 1], [], []>} : vector<8x128xf32>, vector<128x128xf32>, vector<8x128xf32> -> vector<8x128xf32>
    %c0_21 = arith.constant 0 : index
    %c0_22 = arith.constant 0 : index
    %43 = vector.load %arg7[%c0_21, %c0_22] : memref<1x128xf32, #tpu.memory_space<vmem>>, vector<1x128xf32>
    %44 = vector.broadcast %43 : vector<1x128xf32> to vector<8x128xf32>
    %45 = arith.addf %42, %44 : vector<8x128xf32>
    %c0_23 = arith.constant 0 : index
    %c0_24 = arith.constant 0 : index
    %46 = vector.load %arg9[%c0_23, %c0_24] : memref<8x128xf32, #tpu.memory_space<vmem>>, vector<8x128xf32>
    tpu.vector_store %arg9[%c0_23, %c0_24], %40 {strides = array<i32>} : memref<8x128xf32, #tpu.memory_space<vmem>>, vector<8x128xf32>,
    %c0_25 = arith.constant 0 : index
    %c0_26 = arith.constant 0 : index
    %47 = vector.load %arg8[%c0_25, %c0_26] : memref<8x128xf32, #tpu.memory_space<vmem>>, vector<8x128xf32>
    tpu.vector_store %arg8[%c0_25, %c0_26], %45 {strides = array<i32>} : memref<8x128xf32, #tpu.memory_space<vmem>>, vector<8x128xf32>,
    return
  }
  func.func @transform_0(%arg0: i32) -> (i32, i32) {
    %c0_i32 = arith.constant 0 : i32
    %c0_i32_0 = arith.constant 0 : i32
    return %arg0, %c0_i32 : i32, i32
  }
  func.func @transform_1(%arg0: i32) -> (i32, i32) {
    %c0_i32 = arith.constant 0 : i32
    %c0_i32_0 = arith.constant 0 : i32
    %c0_i32_1 = arith.constant 0 : i32
    return %c0_i32, %c0_i32_0 : i32, i32
  }
  func.func @transform_2(%arg0: i32) -> (i32, i32) {
    %c0_i32 = arith.constant 0 : i32
    %c0_i32_0 = arith.constant 0 : i32
    %c0_i32_1 = arith.constant 0 : i32
    return %c0_i32, %c0_i32_0 : i32, i32
  }
  func.func @transform_3(%arg0: i32) -> (i32, i32) {
    %c0_i32 = arith.constant 0 : i32
    %c0_i32_0 = arith.constant 0 : i32
    %c0_i32_1 = arith.constant 0 : i32
    return %c0_i32, %c0_i32_0 : i32, i32
  }
  func.func @transform_4(%arg0: i32) -> (i32, i32) {
    %c0_i32 = arith.constant 0 : i32
    %c0_i32_0 = arith.constant 0 : i32
    %c0_i32_1 = arith.constant 0 : i32
    return %c0_i32, %c0_i32_0 : i32, i32
  }
  func.func @transform_5(%arg0: i32) -> (i32, i32) {
    %c0_i32 = arith.constant 0 : i32
    %c0_i32_0 = arith.constant 0 : i32
    %c0_i32_1 = arith.constant 0 : i32
    return %c0_i32, %c0_i32_0 : i32, i32
  }
  func.func @transform_6(%arg0: i32) -> (i32, i32) {
    %c0_i32 = arith.constant 0 : i32
    %c0_i32_0 = arith.constant 0 : i32
    %c0_i32_1 = arith.constant 0 : i32
    return %c0_i32, %c0_i32_0 : i32, i32
  }
  func.func @transform_7(%arg0: i32) -> (i32, i32) {
    %c0_i32 = arith.constant 0 : i32
    %c0_i32_0 = arith.constant 0 : i32
    return %arg0, %c0_i32 : i32, i32
  }
  func.func @transform_8(%arg0: i32) -> (i32, i32) {
    %c0_i32 = arith.constant 0 : i32
    %c0_i32_0 = arith.constant 0 : i32
    return %arg0, %c0_i32 : i32, i32
  }
}

</mosaic_0001>

<llo_original>
// kernel: multitask_head.1
$region0: #{multitask_head.1}
  #allocation0 [shape = 'u32[]', space=smem, size = 0x4, offset = 0x4, fixed_abs, tag = 'smem constant byte address 0x4 - core index']
  #allocation1 [shape = 'u32[144,128]{1,0:T(1,128)}', space=vmem, size = 0x12000, scoped, tag = 'internal scratch']
  %s0 = inlined_call_operand.vmem [shape: f32[8,128], index: 0, kind: input, shape index: {}]
  %s1 = inlined_call_operand.vmem [shape: f32[1,128], index: 1, kind: input, shape index: {}]
  %s2 = inlined_call_operand.vmem [shape: f32[1,128], index: 2, kind: input, shape index: {}]
  %s3 = inlined_call_operand.vmem [shape: f32[128,128], index: 3, kind: input, shape index: {}]
  %s4 = inlined_call_operand.vmem [shape: f32[1,128], index: 4, kind: input, shape index: {}]
  %s5 = inlined_call_operand.vmem [shape: f32[128,128], index: 5, kind: input, shape index: {}]
  %s6 = inlined_call_operand.vmem [shape: f32[1,128], index: 6, kind: input, shape index: {}]
  %s7 = inlined_call_operand.hbm [shape: f32[8,128], index: 7, kind: output, shape index: {0}]
  %s8 = inlined_call_operand.hbm [shape: f32[8,128], index: 8, kind: output, shape index: {1}]
  %9 = xla_tuple %s7, %s8
  %s10 = sld [smem:[#allocation0]]
  $region46: #{multitask_head.1} parent=0
    _
  %s12 = ssub.s32 1, %s10
  %s13 = scalar_select 0, %s12, %s10
  $region1: #{multitask_head.1} parent=0
    #allocation2 [shape = 'u8[4096]{0}', space=vmem, size = 0x1000, scoped, tag = 'output window, operand 0, single buffered']
    #allocation3 [shape = 's32[1]{0}', space=sflag, size = 0x4, scoped, tag = 'scoped memory for multitask_head.1']
    #allocation4 [shape = 'u8[4096]{0}', space=vmem, size = 0x1000, scoped, tag = 'output window, operand 1, single buffered']
    #allocation5 [shape = 's32[1]{0}', space=sflag, size = 0x4, scoped, tag = 'scoped memory for multitask_head.1']
    %14 = vsyncpa [#allocation3], 0
    %15 = vsyncpa [#allocation5], 0
    // Predicated region
    $region2: #{multitask_head.1} parent=1 // pred_check
      _
    $region3: #{multitask_head.1} parent=1 // pred_check_branch
      %17 = sbr.rel (0) target = $region5
    $region4: #{multitask_head.1} parent=1 // pred_region
      _
    $region5: #{multitask_head.1} parent=1 // pred_fallthru
      _
    // Predicated region
    $region6: #{multitask_head.1} parent=1 // pred_check
      _
    $region7: #{multitask_head.1} parent=1 // pred_check_branch
      %19 = sbr.rel (0) target = $region9
    $region8: #{multitask_head.1} parent=1 // pred_region
      _
    $region9: #{multitask_head.1} parent=1 // pred_fallthru
      _
    // Predicated region
    $region10: #{multitask_head.1} parent=1 // pred_check
      _
    $region11: #{multitask_head.1} parent=1 // pred_check_branch
      %21 = sbr.rel (0) target = $region13
    $region12: #{multitask_head.1} parent=1 // pred_region
      _
    $region13: #{multitask_head.1} parent=1 // pred_fallthru
      _
    // Predicated region
    $region14: #{multitask_head.1} parent=1 // pred_check
      _
    $region15: #{multitask_head.1} parent=1 // pred_check_branch
      %23 = sbr.rel (0) target = $region17
    $region16: #{multitask_head.1} parent=1 // pred_region
      _
    $region17: #{multitask_head.1} parent=1 // pred_fallthru
      _
    // Predicated region
    $region18: #{multitask_head.1} parent=1 // pred_check
      _
    $region19: #{multitask_head.1} parent=1 // pred_check_branch
      %25 = sbr.rel (0) target = $region21
    $region20: #{multitask_head.1} parent=1 // pred_region
      _
    $region21: #{multitask_head.1} parent=1 // pred_fallthru
      _
    // Predicated region
    $region22: #{multitask_head.1} parent=1 // pred_check
      _
    $region23: #{multitask_head.1} parent=1 // pred_check_branch
      %27 = sbr.rel (0) target = $region25
    $region24: #{multitask_head.1} parent=1 // pred_region
      _
    $region25: #{multitask_head.1} parent=1 // pred_fallthru
      _
    // Predicated region
    $region26: #{multitask_head.1} parent=1 // pred_check
      _
    $region27: #{multitask_head.1} parent=1 // pred_check_branch
      %29 = sbr.rel (0) target = $region29
    $region28: #{multitask_head.1} parent=1 // pred_region
      _
    $region29: #{multitask_head.1} parent=1 // pred_fallthru
      _
    %v30 = vld [vmem:[%s0] sm:$0xff]
    %v31 = vlaneseq
    %v32 = vand.u32 %v31, 127
    %vm33 = vcmp.lt.s32.totalorder %v32, 32
    %34 = vadd.xlane.f32.xlu0 %v30
    %v35 = vpop.xlane.xlu0 %34
    %v36 = vmul.f32 %v35, 0.03125
    %v37 = vsub.f32 %v30, %v36
    %v38 = vsel %vm33, %v37, 0.0
    %v39 = vmul.f32 %v38, %v38
    %40 = vadd.xlane.f32.xlu0 %v39
    %v41 = vpop.xlane.xlu0 %40
    %v42 = vmul.f32 %v41, 0.03125
    %v43 = vadd.f32 %v42, 1e-05
    %v44 = vrsqrt.pop %v43
    %v45 = vmul.f32 %v38, %v44
    %v46 = vld [vmem:[%s1] sm:$0x1]
    %v48 = vlaneseq
    %v49 = vshrl.u32 %v48, 7
    %v50 = vsub.s32 0, %v49
    %v51 = vrot.slane %v46, %v50
    %v53 = vmul.f32 %v45, %v51
    %v54 = vld [vmem:[%s2] sm:$0x1]
    %v56 = vlaneseq
    %v57 = vshrl.u32 %v56, 7
    %v58 = vsub.s32 0, %v57
    %v59 = vrot.slane %v54, %v58
    %v61 = vadd.f32 %v53, %v59
    %v62 = vld [vmem:[%s3] sm:$0xff]
    %v63 = vld [vmem:[%s3 + $0x8] sm:$0xff]
    %v64 = vld [vmem:[%s3 + $0x10] sm:$0xff]
    %v65 = vld [vmem:[%s3 + $0x18] sm:$0xff]
    %v66 = vld [vmem:[%s3 + $0x20] sm:$0xff]
    %v67 = vld [vmem:[%s3 + $0x28] sm:$0xff]
    %v68 = vld [vmem:[%s3 + $0x30] sm:$0xff]
    %v69 = vld [vmem:[%s3 + $0x38] sm:$0xff]
    %v70 = vld [vmem:[%s3 + $0x40] sm:$0xff]
    %v71 = vld [vmem:[%s3 + $0x48] sm:$0xff]
    %v72 = vld [vmem:[%s3 + $0x50] sm:$0xff]
    %v73 = vld [vmem:[%s3 + $0x58] sm:$0xff]
    %v74 = vld [vmem:[%s3 + $0x60] sm:$0xff]
    %v75 = vld [vmem:[%s3 + $0x68] sm:$0xff]
    %v76 = vld [vmem:[%s3 + $0x70] sm:$0xff]
    %v77 = vld [vmem:[%s3 + $0x78] sm:$0xff]
    %v78 = vld [vmem:[%s4] sm:$0x1]
    %v80 = vlaneseq
    %v81 = vshrl.u32 %v80, 7
    %v82 = vsub.s32 0, %v81
    %v83 = vrot.slane %v78, %v82
    %85 = vmatprep.subr.mxu0 0.0
    %86 = vmatpush1.msra.mxu0 %v77
    %87 = vmatprep.subr.mxu0 0.0
    %88 = vmatpush1.msra.mxu0 %v76
    %89 = vmatprep.subr.mxu0 0.0
    %90 = vmatpush1.msra.mxu0 %v75
    %91 = vmatprep.subr.mxu0 0.0
    %92 = vmatpush1.msra.mxu0 %v74
    %93 = vmatprep.subr.mxu0 0.0
    %94 = vmatpush1.msra.mxu0 %v73
    %95 = vmatprep.subr.mxu0 0.0
    %96 = vmatpush1.msra.mxu0 %v72
    %97 = vmatprep.subr.mxu0 0.0
    %98 = vmatpush1.msra.mxu0 %v71
    %99 = vmatprep.subr.mxu0 0.0
    %100 = vmatpush1.msra.mxu0 %v70
    %101 = vmatprep.subr.mxu0 0.0
    %102 = vmatpush1.msra.mxu0 %v69
    %103 = vmatprep.subr.mxu0 0.0
    %104 = vmatpush1.msra.mxu0 %v68
    %105 = vmatprep.subr.mxu0 0.0
    %106 = vmatpush1.msra.mxu0 %v67
    %107 = vmatprep.subr.mxu0 0.0
    %108 = vmatpush1.msra.mxu0 %v66
    %109 = vmatprep.subr.mxu0 0.0
    %110 = vmatpush1.msra.mxu0 %v65
    %111 = vmatprep.subr.mxu0 0.0
    %112 = vmatpush1.msra.mxu0 %v64
    %113 = vmatprep.subr.mxu0 0.0
    %114 = vmatpush1.msra.mxu0 %v63
    %115 = vmatprep.subr.mxu0 0.0
    %116 = vmatpush1.msra.mxu0 %v62
    %117 = vmatprep.subr.mxu0 0.0
    %118 = vmatpush2.msra.mxu0 0.0
    %119 = vmatprep.subr.mxu0 0.0
    %120 = vmatpush2.msra.mxu0 0.0
    %121 = vmatprep.subr.mxu0 0.0
    %122 = vmatpush2.msra.mxu0 0.0
    %123 = vmatprep.subr.mxu0 0.0
    %124 = vmatpush2.msra.mxu0 0.0
    %125 = vmatprep.subr.mxu0 0.0
    %126 = vmatpush2.msra.mxu0 0.0
    %127 = vmatprep.subr.mxu0 0.0
    %128 = vmatpush2.msra.mxu0 0.0
    %129 = vmatprep.subr.mxu0 0.0
    %130 = vmatpush2.msra.mxu0 0.0
    %131 = vmatprep.subr.mxu0 0.0
    %132 = vmatpush2.msra.mxu0 0.0
    %133 = vmatprep.subr.mxu0 0.0
    %134 = vmatpush2.msra.mxu0 0.0
    %135 = vmatprep.subr.mxu0 0.0
    %136 = vmatpush2.msra.mxu0 0.0
    %137 = vmatprep.subr.mxu0 0.0
    %138 = vmatpush2.msra.mxu0 0.0
    %139 = vmatprep.subr.mxu0 0.0
    %140 = vmatpush2.msra.mxu0 0.0
    %141 = vmatprep.subr.mxu0 0.0
    %142 = vmatpush2.msra.mxu0 0.0
    %143 = vmatprep.subr.mxu0 0.0
    %144 = vmatpush2.msra.mxu0 0.0
    %145 = vmatprep.subr.mxu0 0.0
    %146 = vmatpush2.msra.mxu0 0.0
    %147 = vmatprep.subr.mxu0 0.0
    %148 = vmatpush2.msra.mxu0 0.0
    %149 = vmatprep.mubr.f32.mxu0 0.0
    %150 = vmatmul.mubr.f32.gmra.mxu0 %v61
    %v151 = vpop.f32.mrf.mxu0
    %v152 = vadd.f32 %v83, %v151
    %v153 = vpop.f32.mrf.mxu0
    %154 = vdwg.mxu0
    %v155 = vmul.f32 %v152, 0.5
    %v156 = vmul.f32 %v152, 0.70710677
    %v157 = verf.f32.pop %v156
    %v158 = vadd.f32 %v157, 1.0
    %v159 = vmul.f32 %v155, %v158
    %v160 = vld [vmem:[%s5] sm:$0xff]
    %v161 = vld [vmem:[%s5 + $0x8] sm:$0xff]
    %v162 = vld [vmem:[%s5 + $0x10] sm:$0xff]
    %v163 = vld [vmem:[%s5 + $0x18] sm:$0xff]
    %v164 = vld [vmem:[%s5 + $0x20] sm:$0xff]
    %v165 = vld [vmem:[%s5 + $0x28] sm:$0xff]
    %v166 = vld [vmem:[%s5 + $0x30] sm:$0xff]
    %v167 = vld [vmem:[%s5 + $0x38] sm:$0xff]
    %v168 = vld [vmem:[%s5 + $0x40] sm:$0xff]
    %v169 = vld [vmem:[%s5 + $0x48] sm:$0xff]
    %v170 = vld [vmem:[%s5 + $0x50] sm:$0xff]
    %v171 = vld [vmem:[%s5 + $0x58] sm:$0xff]
    %v172 = vld [vmem:[%s5 + $0x60] sm:$0xff]
    %v173 = vld [vmem:[%s5 + $0x68] sm:$0xff]
    %v174 = vld [vmem:[%s5 + $0x70] sm:$0xff]
    %v175 = vld [vmem:[%s5 + $0x78] sm:$0xff]
    %v176 = vld [vmem:[%s6] sm:$0x1]
    %v178 = vlaneseq
    %v179 = vshrl.u32 %v178, 7
    %v180 = vsub.s32 0, %v179
    %v181 = vrot.slane %v176, %v180
    %183 = vmatprep.subr.mxu0 0.0
    %184 = vmatpush1.msra.mxu0 %v175
    %185 = vmatprep.subr.mxu0 0.0
    %186 = vmatpush1.msra.mxu0 %v174
    %187 = vmatprep.subr.mxu0 0.0
    %188 = vmatpush1.msra.mxu0 %v173
    %189 = vmatprep.subr.mxu0 0.0
    %190 = vmatpush1.msra.mxu0 %v172
    %191 = vmatprep.subr.mxu0 0.0
    %192 = vmatpush1.msra.mxu0 %v171
    %193 = vmatprep.subr.mxu0 0.0
    %194 = vmatpush1.msra.mxu0 %v170
    %195 = vmatprep.subr.mxu0 0.0
    %196 = vmatpush1.msra.mxu0 %v169
    %197 = vmatprep.subr.mxu0 0.0
    %198 = vmatpush1.msra.mxu0 %v168
    %199 = vmatprep.subr.mxu0 0.0
    %200 = vmatpush1.msra.mxu0 %v167
    %201 = vmatprep.subr.mxu0 0.0
    %202 = vmatpush1.msra.mxu0 %v166
    %203 = vmatprep.subr.mxu0 0.0
    %204 = vmatpush1.msra.mxu0 %v165
    %205 = vmatprep.subr.mxu0 0.0
    %206 = vmatpush1.msra.mxu0 %v164
    %207 = vmatprep.subr.mxu0 0.0
    %208 = vmatpush1.msra.mxu0 %v163
    %209 = vmatprep.subr.mxu0 0.0
    %210 = vmatpush1.msra.mxu0 %v162
    %211 = vmatprep.subr.mxu0 0.0
    %212 = vmatpush1.msra.mxu0 %v161
    %213 = vmatprep.subr.mxu0 0.0
    %214 = vmatpush1.msra.mxu0 %v160
    %215 = vmatprep.subr.mxu0 0.0
    %216 = vmatpush2.msra.mxu0 0.0
    %217 = vmatprep.subr.mxu0 0.0
    %218 = vmatpush2.msra.mxu0 0.0
    %219 = vmatprep.subr.mxu0 0.0
    %220 = vmatpush2.msra.mxu0 0.0
    %221 = vmatprep.subr.mxu0 0.0
    %222 = vmatpush2.msra.mxu0 0.0
    %223 = vmatprep.subr.mxu0 0.0
    %224 = vmatpush2.msra.mxu0 0.0
    %225 = vmatprep.subr.mxu0 0.0
    %226 = vmatpush2.msra.mxu0 0.0
    %227 = vmatprep.subr.mxu0 0.0
    %228 = vmatpush2.msra.mxu0 0.0
    %229 = vmatprep.subr.mxu0 0.0
    %230 = vmatpush2.msra.mxu0 0.0
    %231 = vmatprep.subr.mxu0 0.0
    %232 = vmatpush2.msra.mxu0 0.0
    %233 = vmatprep.subr.mxu0 0.0
    %234 = vmatpush2.msra.mxu0 0.0
    %235 = vmatprep.subr.mxu0 0.0
    %236 = vmatpush2.msra.mxu0 0.0
    %237 = vmatprep.subr.mxu0 0.0
    %238 = vmatpush2.msra.mxu0 0.0
    %239 = vmatprep.subr.mxu0 0.0
    %240 = vmatpush2.msra.mxu0 0.0
    %241 = vmatprep.subr.mxu0 0.0
    %242 = vmatpush2.msra.mxu0 0.0
    %243 = vmatprep.subr.mxu0 0.0
    %244 = vmatpush2.msra.mxu0 0.0
    %245 = vmatprep.subr.mxu0 0.0
    %246 = vmatpush2.msra.mxu0 0.0
    %247 = vmatprep.mubr.f32.mxu0 0.0
    %248 = vmatmul.mubr.f32.gmra.mxu0 %v159
    %v249 = vpop.f32.mrf.mxu0
    %v250 = vadd.f32 %v181, %v249
    %v251 = vpop.f32.mrf.mxu0
    %252 = vdwg.mxu0
    %253 = vst [vmem:[#allocation4] sm:$0xff] %v159
    %254 = vst [vmem:[#allocation2] sm:$0xff] %v250
    // Predicated region
    $region30: #{multitask_head.1} parent=1 // pred_check
      _
    $region31: #{multitask_head.1} parent=1 // pred_check_branch
      %256 = sbr.rel (0) target = $region33
    $region32: #{multitask_head.1} parent=1 // pred_region
      %s258 = ssub.s32 128, 128
      %259 = vsyncadd [#allocation3], %s258
      %s261 = sshll.u32 [#allocation2], 4
      %s262 = int_to_ptr.vmem [resolvable:$true] %s261
      %264 = dma.vmem_to_hbm [thread:$0]  %s262, 128, %s7, [#allocation3]
    $region33: #{multitask_head.1} parent=1 // pred_fallthru
      _
    // Predicated region
    $region34: #{multitask_head.1} parent=1 // pred_check
      _
    $region35: #{multitask_head.1} parent=1 // pred_check_branch
      %266 = sbr.rel (0) target = $region37
    $region36: #{multitask_head.1} parent=1 // pred_region
      %s268 = ssub.s32 128, 128
      %269 = vsyncadd [#allocation5], %s268
      %s271 = sshll.u32 [#allocation4], 4
      %s272 = int_to_ptr.vmem [resolvable:$true] %s271
      %274 = dma.vmem_to_hbm [thread:$0]  %s272, 128, %s8, [#allocation5]
    $region37: #{multitask_head.1} parent=1 // pred_fallthru
      _
    // Predicated region
    $region38: #{multitask_head.1} parent=1 // pred_check
      _
    $region39: #{multitask_head.1} parent=1 // pred_check_branch
      %276 = sbr.rel (0) target = $region41
    $region40: #{multitask_head.1} parent=1 // pred_region
      %277 = dma.done [#allocation3], 128
    $region41: #{multitask_head.1} parent=1 // pred_fallthru
      _
    // Predicated region
    $region42: #{multitask_head.1} parent=1 // pred_check
      _
    $region43: #{multitask_head.1} parent=1 // pred_check_branch
      %279 = sbr.rel (0) target = $region45
    $region44: #{multitask_head.1} parent=1 // pred_region
      %280 = dma.done [#allocation5], 128
    $region45: #{multitask_head.1} parent=1 // pred_fallthru
      _
    %281 = vsyncpa [#allocation3], 1
    %282 = vsyncpa [#allocation5], 1

</llo_original>
